<compile_context>
chip_gen: v7x
topology: tpu7x:2x2x1
jax: 0.10.0
libtpu: 0.0.40
codegen_flags: <defaults>
</compile_context>

<pallas_src>
import functools
import math

import jax
import jax.numpy as jnp
from jax.experimental import pallas as pl
from jax.experimental.pallas import tpu as pltpu

MAX_POS = 1000  # matches torch.arange(0, 1000) in __init__


def build_pe_table(dim: int) -> jnp.ndarray:
    """Reference table, identical math to the PyTorch __init__ (used for checking)."""
    assert dim % 2 == 0, "dim must be even (the PyTorch module requires it too)"
    position = jnp.arange(0, MAX_POS, dtype=jnp.float32)[:, None]            # (1000, 1)
    div_term = jnp.exp(
        jnp.arange(0, dim, 2, dtype=jnp.float32) * (-jnp.log(10000.0) / dim)
    )                                                                        # (dim//2,)
    angles = position * div_term                                             # (1000, dim//2)
    pe = jnp.zeros((MAX_POS, dim), dtype=jnp.float32)
    pe = pe.at[:, 0::2].set(jnp.sin(angles))
    pe = pe.at[:, 1::2].set(jnp.cos(angles))
    return pe


def _make_kernel(dim: int, pad_dim: int):
    neg_log_over_dim = -math.log(10000.0) / float(dim)
    half_pi = math.pi / 2.0

    def kernel(ts_ref, out_ref):
        # ts_ref : (TB, 1)       int32 timesteps for this tile
        # out_ref: (TB, pad_dim) f32 embedding tile (lane-dense, pad_dim % 128 == 0)
        ts = jnp.clip(ts_ref[...], 0, MAX_POS - 1).astype(jnp.float32)        # (TB, 1)
        # Per-lane constants built in-kernel (only pad_dim transcendentals, not TB*pad_dim).
        lane = jax.lax.broadcasted_iota(jnp.int32, (1, pad_dim), 1)           # (1, pad_dim)
        two_j = ((lane >> 1) << 1).astype(jnp.float32)                        # 0,0,2,2,4,4,...
        freq = jnp.exp(two_j * neg_log_over_dim)                              # (1, pad_dim)
        phase = jnp.where((lane & 1) == 0, 0.0, half_pi).astype(jnp.float32)  # 0, pi/2, ...
        # Single sin per element: even lanes -> sin(angle), odd lanes -> sin(angle+pi/2)=cos.
        out_ref[...] = jnp.sin(ts * freq + phase)                             # (TB, pad_dim)

    return kernel


@functools.partial(jax.jit, static_argnames=("dim",))
def sinusoidal_pos_emb(timesteps: jnp.ndarray, dim: int) -> jnp.ndarray:
    """Equivalent of SinusoidalPosEmb.forward: pe[timesteps.long()]."""
    assert dim % 2 == 0, "dim must be even"
    B = int(timesteps.shape[0])

    # Lane-dense output slab: pad dim up to a multiple of 128 so every store is a
    # full-width unmasked vst; the extra lanes are sliced off in the wrapper.
    pad_dim = ((dim + 127) // 128) * 128

    # Batch tile: sublane-aligned, as large as possible (fewer grid steps amortize the
    # ~0.35us/step overhead; mem-bound kernels reach roofline with 512+ row tiles),
    # but keep the double-buffered output tile <= ~4 MiB so it fits under every
    # generation's default scoped-VMEM limit (v5e 16 MiB / v6e 32 MiB / v7x 32 MiB).
    tb_cap = max(8, min(1024, ((4 * 1024 * 1024) // (2 * pad_dim * 4)) // 8 * 8))
    b8 = ((B + 7) // 8) * 8
    TB = b8 if b8 <= tb_cap else tb_cap
    padded_B = ((B + TB - 1) // TB) * TB

    ts_col = timesteps.astype(jnp.int32).reshape(B, 1)
    if padded_B != B:
        ts_col = jnp.pad(ts_col, ((0, padded_B - B), (0, 0)))

    out = pl.pallas_call(
        _make_kernel(dim, pad_dim),
        out_shape=jax.ShapeDtypeStruct((padded_B, pad_dim), jnp.float32),
        grid_spec=pltpu.PrefetchScalarGridSpec(
            num_scalar_prefetch=0,
            grid=(padded_B // TB,),
            in_specs=[pl.BlockSpec((TB, 1), lambda i: (i, 0))],   # timestep column tile
            out_specs=pl.BlockSpec((TB, pad_dim), lambda i: (i, 0)),
        ),
        compiler_params=pltpu.CompilerParams(
            # Independent batch tiles; lets megacore shard the grid when it has >1 step.
            dimension_semantics=("parallel",),
        ),
    )(ts_col)

    if padded_B != B or pad_dim != dim:
        out = out[:B, :dim]
    return out


if __name__ == "__main__":
    key = jax.random.PRNGKey(0)
    k1, k2 = jax.random.split(key)

    # Primary check: lane-aligned dim, small batch (typical diffusion time-embedding call).
    dim, B = 128, 8
    timesteps = jax.random.randint(k1, (B,), 0, MAX_POS, dtype=jnp.int32)
    out = jax.block_until_ready(sinusoidal_pos_emb(timesteps, dim))
    ref = build_pe_table(dim)[timesteps]
    assert out.shape == (B, dim), out.shape
    assert out.dtype == jnp.float32, out.dtype
    # atol=1e-4: the odd-lane sin(x + pi/2) argument rounds at ~ulp(1000)/2 ~= 3e-5 for the
    # lowest-frequency lane near ts=999, so bit-equality with cos(x) is not expected.
    assert jnp.allclose(out, ref, atol=1e-4), float(jnp.max(jnp.abs(out - ref)))

    # Secondary check: dim not a multiple of 128 and ragged batch exercise the pad/slice paths.
    dim2, B2 = 64, 5
    ts2 = jax.random.randint(k2, (B2,), 0, MAX_POS, dtype=jnp.int32)
    out2 = jax.block_until_ready(sinusoidal_pos_emb(ts2, dim2))
    ref2 = build_pe_table(dim2)[ts2]
    assert out2.shape == (B2, dim2), out2.shape
    assert jnp.allclose(out2, ref2, atol=1e-4), float(jnp.max(jnp.abs(out2 - ref2)))

    print("KERNEL_OK")
</pallas_src>

<mosaic_0001>
module attributes {stable_mosaic.version = 11 : i64} {
  func.func @kernel(%arg0: i32, %arg1: memref<8x1xi32, #tpu.memory_space<vmem>>, %arg2: memref<8x128xf32, #tpu.memory_space<vmem>>) attributes {dimension_semantics = [#tpu.dimension_semantics<parallel>], iteration_bounds = array<i64: 1>, scalar_prefetch = 0 : i64, scratch_operands = 0 : i64, tpu.core_type = #tpu.core_type<tc>, window_params = [{transform_indices = @transform_0, window_bounds = array<i64: 8, 1>}, {transform_indices = @transform_1, window_bounds = array<i64: 8, 128>}]} {
    %c0 = arith.constant 0 : index
    %c0_0 = arith.constant 0 : index
    %0 = vector.load %arg1[%c0, %c0_0] : memref<8x1xi32, #tpu.memory_space<vmem>>, vector<8x1xi32>
    %c0_i32 = arith.constant 0 : i32
    %c999_i32 = arith.constant 999 : i32
    %1 = vector.broadcast %c0_i32 : i32 to vector<8x1xi32>
    %2 = arith.maxsi %1, %0 : vector<8x1xi32>
    %3 = vector.broadcast %c999_i32 : i32 to vector<8x1xi32>
    %4 = arith.minsi %3, %2 : vector<8x1xi32>
    %5 = arith.sitofp %4 : vector<8x1xi32> to vector<8x1xf32>
    %6 = tpu.iota {dimensions = array<i32: 1>} : vector<1x128xi32>
    %c1_i32 = arith.constant 1 : i32
    %7 = vector.broadcast %c1_i32 : i32 to vector<1x128xi32>
    %8 = arith.shrsi %6, %7 : vector<1x128xi32>
    %c1_i32_1 = arith.constant 1 : i32
    %9 = vector.broadcast %c1_i32_1 : i32 to vector<1x128xi32>
    %10 = arith.shli %8, %9 : vector<1x128xi32>
    %11 = arith.sitofp %10 : vector<1x128xi32> to vector<1x128xf32>
    %cst = arith.constant -0.0719557852 : f32
    %12 = vector.broadcast %cst : f32 to vector<1x128xf32>
    %13 = arith.mulf %11, %12 : vector<1x128xf32>
    %14 = math.exp %13 : vector<1x128xf32>
    %c1_i32_2 = arith.constant 1 : i32
    %15 = vector.broadcast %c1_i32_2 : i32 to vector<1x128xi32>
    %16 = arith.andi %6, %15 : vector<1x128xi32>
    %c0_i32_3 = arith.constant 0 : i32
    %17 = vector.broadcast %c0_i32_3 : i32 to vector<1x128xi32>
    %18 = arith.cmpi eq, %16, %17 : vector<1x128xi32>
    %cst_4 = arith.constant 0.000000e+00 : f32
    %cst_5 = arith.constant 1.57079637 : f32
    %19 = vector.broadcast %cst_4 : f32 to vector<1x128xf32>
    %20 = vector.broadcast %cst_5 : f32 to vector<1x128xf32>
    %21 = arith.select %18, %19, %20 : vector<1x128xi1>, vector<1x128xf32>
    %22 = vector.broadcast %5 : vector<8x1xf32> to vector<8x128xf32>
    %23 = vector.broadcast %14 : vector<1x128xf32> to vector<8x128xf32>
    %24 = arith.mulf %22, %23 : vector<8x128xf32>
    %25 = vector.broadcast %21 : vector<1x128xf32> to vector<8x128xf32>
    %26 = arith.addf %24, %25 : vector<8x128xf32>
    %27 = math.sin %26 : vector<8x128xf32>
    %c0_6 = arith.constant 0 : index
    %c0_7 = arith.constant 0 : index
    %28 = vector.load %arg2[%c0_6, %c0_7] : memref<8x128xf32, #tpu.memory_space<vmem>>, vector<8x128xf32>
    tpu.vector_store %arg2[%c0_6, %c0_7], %27 {strides = array<i32>} : memref<8x128xf32, #tpu.memory_space<vmem>>, vector<8x128xf32>,
    return
  }
  func.func @transform_0(%arg0: i32) -> (i32, i32) {
    %c0_i32 = arith.constant 0 : i32
    %c0_i32_0 = arith.constant 0 : i32
    return %arg0, %c0_i32 : i32, i32
  }
  func.func @transform_1(%arg0: i32) -> (i32, i32) {
    %c0_i32 = arith.constant 0 : i32
    %c0_i32_0 = arith.constant 0 : i32
    return %arg0, %c0_i32 : i32, i32
  }
}

</mosaic_0001>

<llo_original>
// kernel: sinusoidal_pos_emb.1
$region0: #{sinusoidal_pos_emb.1}
  #allocation0 [shape = 'u32[]', space=smem, size = 0x4, offset = 0x4, fixed_abs, tag = 'smem constant byte address 0x4 - core index']
  #allocation1 [shape = 'u32[144,128]{1,0:T(1,128)}', space=vmem, size = 0x12000, scoped, tag = 'internal scratch']
  %s0 = inlined_call_operand.vmem [shape: s32[8,1], index: 0, kind: input, shape index: {}]
  %s1 = inlined_call_operand.hbm [shape: f32[8,128], index: 1, kind: output, shape index: {}]
  %s2 = sld [smem:[#allocation0]]
  $region14: #{sinusoidal_pos_emb.1} parent=0
    _
  %s4 = ssub.s32 1, %s2
  %s5 = scalar_select 0, %s4, %s2
  $region1: #{sinusoidal_pos_emb.1} parent=0
    #allocation2 [shape = 'u8[4096]{0}', space=vmem, size = 0x1000, scoped, tag = 'output window, operand 0, single buffered']
    #allocation3 [shape = 's32[1]{0}', space=sflag, size = 0x4, scoped, tag = 'scoped memory for sinusoidal_pos_emb.1']
    %6 = vsyncpa [#allocation3], 0
    // Predicated region
    $region2: #{sinusoidal_pos_emb.1} parent=1 // pred_check
      _
    $region3: #{sinusoidal_pos_emb.1} parent=1 // pred_check_branch
      %8 = sbr.rel (0) target = $region5
    $region4: #{sinusoidal_pos_emb.1} parent=1 // pred_region
      _
    $region5: #{sinusoidal_pos_emb.1} parent=1 // pred_fallthru
      _
    %v9 = vld [vmem:[%s0] sm:$0xff]
    %vm10 = vcmp.gt.s32.totalorder %v9, 0
    %v11 = vsel %vm10, %v9, 0
    %vm12 = vcmp.lt.s32.totalorder %v11, 999
    %v13 = vsel %vm12, %v11, 999
    %v14 = vcvt.s32.f32 %v13
    %v15 = vlaneseq
    %v16 = vand.u32 %v15, 127
    %v17 = vshra.s32 %v16, 1
    %v18 = vshll.u32 %v17, 1
    %v19 = vcvt.s32.f32 %v18
    %v20 = vmul.f32 %v19, -0.071955785
    %v21 = vmul.f32 %v20, 1.442695
    %v22 = vpow.pop %v21
    %v23 = vand.u32 %v16, 1
    %vm24 = vcmp.eq.s32.totalorder %v23, 0
    %v25 = vsel %vm24, 0.0, 1.5707964
    %27 = vset.pattern.permute.xlu0 0
    %28 = vperm.xlu0 %27, %v14
    %v29 = vpop.permute.xlu0 %28
    %v31 = vmul.f32 %v29, %v22
    %v32 = vadd.f32 %v31, %v25
    %v33 = vand.u32 2147483647, %v32
    %vm34 = vcmp.le.f32.partialorder %v33, 0.7853982
    %vm35 = vcmp.lt.s32.totalorder %v32, 0
    %v36 = vand.u32 %v32, 2139095040
    %v37 = vshrl.u32 %v36, 23
    %v38 = vsub.s32 %v37, 127
    %v39 = vand.u32 2147483647, %v32
    %v40 = vand.u32 %v39, 8388607
    %v41 = vor.u32 %v40, 8388608
    %v42 = vsub.s32 0, %v41
    %v43 = vadd.s32 %v38, 1
    %vm44 = vcmp.gt.s32.totalorder %v43, 0
    %v45 = vsel %vm44, %v43, 0
    %v46 = vshrl.u32 %v45, 5
    %v47 = vand.u32 %v45, 31
    %v48 = vsub.s32 32, %v47
    %v49 = vshrl.u32 683565275, %v48
    %v50 = vshll.u32 683565275, %v47
    %v51 = vshrl.u32 2475754826, %v48
    %v52 = vor.u32 %v50, %v51
    %v53 = vshll.u32 2475754826, %v47
    %v54 = vshrl.u32 2131351028, %v48
    %v55 = vor.u32 %v53, %v54
    %v56 = vshll.u32 2131351028, %v47
    %v57 = vshrl.u32 2102212464, %v48
    %v58 = vor.u32 %v56, %v57
    %v59 = vshll.u32 2102212464, %v47
    %v60 = vshrl.u32 920167782, %v48
    %v61 = vor.u32 %v59, %v60
    %v62 = vshll.u32 920167782, %v47
    %v63 = vshrl.u32 1326507024, %v48
    %v64 = vor.u32 %v62, %v63
    %vm65 = vcmp.lt.s32.totalorder %v46, 1
    %vm66 = vcmp.lt.s32.totalorder %v46, 2
    %vm67 = vcmp.lt.s32.totalorder %v46, 3
    %vm68 = vcmp.lt.s32.totalorder %v46, 4
    %v69 = vsel %vm65, %v49, %v52
    %v70 = vsel %vm68, %v58, 2102212464
    %v71 = vsel %vm67, %v55, %v70
    %v72 = vsel %vm66, %v69, %v71
    %v73 = vsel %vm65, %v52, %v55
    %v74 = vsel %vm68, %v61, 920167782
    %v75 = vsel %vm67, %v58, %v74
    %v76 = vsel %vm66, %v73, %v75
    %v77 = vsel %vm65, %v55, %v58
    %v78 = vsel %vm68, %v64, 1326507024
    %v79 = vsel %vm67, %v61, %v78
    %v80 = vsel %vm66, %v77, %v79
    %v81 = vshll.u32 %v41, 8
    %v82 = vmul.u32.u64.compose %v81, %v80
    %v83 = vextract.low.u32 %v82
    %v84 = vextract.high.u32 %v82
    %v85 = vmul.u32.u64.compose %v81, %v76
    %v86 = vextract.low.u32 %v85
    %v87 = vextract.high.u32 %v85
    %v88 = vmul.u32 %v81, %v72
    %v89 = vadd.s32 %v84, %v86
    %vm90 = vc.u32 %v84, %v86
    %v91 = vadd.s32 %v87, 1
    %v92 = vsel %vm90, %v91, %v87
    %v93 = vadd.s32 %v88, %v92
    %v94 = vadd.s32 %v93, 536870912
    %v95 = vshrl.u32 %v94, 30
    %v96 = vshll.u32 %v95, 30
    %v97 = vsub.s32 %v93, %v96
    %vm98 = vcmp.lt.s32.totalorder %v97, 0
    %v99 = vsub.s32 0, %v97
    %v100 = vsel %vm98, %v99, %v97
    %v101 = vclz %v100
    %v102 = vsub.s32 %v101, 2
    %vm103 = vcmp.gt.s32.totalorder 0, %v102
    %v104 = vsel %vm103, 0, %v102
    %v105 = vsub.s32 32, %v104
    %v106 = vshll.u32 %v97, %v104
    %v107 = vshrl.u32 %v89, %v105
    %v108 = vor.u32 %v106, %v107
    %v109 = vsub.s32 4294967266, %v104
    %v110 = vadd.s32 %v109, 127
    %v111 = vshll.u32 %v110, 23
    %v112 = vor.u32 4788187, %v111
    %v113 = vand.u32 2147483647, %v112
    %v115 = vcvt.s32.f32 %v108
    %v116 = vmul.f32 %v115, %v113
    %v117 = vxor.u32 %v116, 2147483648
    %v118 = vsel %vm35, %v117, %v116
    %v119 = vsub.s32 4, %v95
    %v120 = vsel %vm35, %v119, %v95
    %v121 = vsel %vm34, %v32, %v118
    %v122 = vsel %vm34, 0, %v120
    %v123 = vcosq.f32.pop %v121
    %v124 = vsinq.f32.pop %v121
    %vm125 = vweird.f32 %v32
    %v126 = vadd.s32 %v122, 3
    %v127 = vand.u32 %v126, 3
    %vm128 = vcmp.lt.s32.totalorder %v127, 2
    %vm129 = vcmp.eq.s32.totalorder %v127, 0
    %v130 = vxor.u32 %v124, 2147483648
    %v131 = vsel %vm129, %v123, %v130
    %vm132 = vcmp.eq.s32.totalorder %v127, 2
    %v133 = vxor.u32 %v123, 2147483648
    %v134 = vsel %vm132, %v133, %v124
    %v135 = vsel %vm128, %v131, %v134
    %v136 = vsel %vm125, nan, %v135
    %137 = vst [vmem:[#allocation2] sm:$0xff] %v136
    // Predicated region
    $region6: #{sinusoidal_pos_emb.1} parent=1 // pred_check
      _
    $region7: #{sinusoidal_pos_emb.1} parent=1 // pred_check_branch
      %139 = sbr.rel (0) target = $region9
    $region8: #{sinusoidal_pos_emb.1} parent=1 // pred_region
      %s141 = ssub.s32 128, 128
      %142 = vsyncadd [#allocation3], %s141
      %s144 = sshll.u32 [#allocation2], 4
      %s145 = int_to_ptr.vmem [resolvable:$true] %s144
      %147 = dma.vmem_to_hbm [thread:$0]  %s145, 128, %s1, [#allocation3]
    $region9: #{sinusoidal_pos_emb.1} parent=1 // pred_fallthru
      _
    // Predicated region
    $region10: #{sinusoidal_pos_emb.1} parent=1 // pred_check
      _
    $region11: #{sinusoidal_pos_emb.1} parent=1 // pred_check_branch
      %149 = sbr.rel (0) target = $region13
    $region12: #{sinusoidal_pos_emb.1} parent=1 // pred_region
      %150 = dma.done [#allocation3], 128
    $region13: #{sinusoidal_pos_emb.1} parent=1 // pred_fallthru
      _
    %151 = vsyncpa [#allocation3], 1

</llo_original>
